<compile_context>
chip_gen: v5e
topology: v5e:2x2
jax: 0.10.0
libtpu: 0.0.40
codegen_flags: <defaults>
</compile_context>

<pallas_src>
import functools

import jax
import jax.numpy as jnp
from jax.experimental import pallas as pl
from jax.experimental.pallas import tpu as pltpu


def _round_up(n, m):
    return ((n + m - 1) // m) * m


# ---------------------------------------------------------------------------
# Kernel
# ---------------------------------------------------------------------------
def _ais_kernel(x_ref, h_ref, mw_ref, mb_ref, gwi_ref, gwh_ref, gb_ref,
                out_ref, *, in_dim, ais):
    f32 = jnp.float32
    cdt = mw_ref.dtype              # MXU compute dtype (f32 or bf16)

    x = x_ref[...]                  # (TB, in_dim)
    h = h_ref[...]                  # (TB, ais)

    # --- MLP encoder: relu(l1) -> relu(l2) -> relu(l3) ---------------------
    # Weights are zero-padded to 128x128 tiles; padded output lanes stay
    # exactly 0 through the ReLUs.
    w1 = mw_ref[0][:in_dim, :]                                      # (in_dim,128)
    a1 = jnp.maximum(
        jnp.dot(x.astype(cdt), w1, preferred_element_type=f32) + mb_ref[0:1, :],
        0.0)
    a2 = jnp.maximum(
        jnp.dot(a1.astype(cdt), mw_ref[1], preferred_element_type=f32)
        + mb_ref[1:2, :], 0.0)
    a3 = jnp.maximum(
        jnp.dot(a2.astype(cdt), mw_ref[2], preferred_element_type=f32)
        + mb_ref[2:3, :], 0.0)                                      # (TB, 128)

    # --- GRUCell: two fused lane-dense gate matmuls -------------------------
    # Packed gate columns: [ r | z | i_n | h_n ], each `ais` lanes wide.
    gates = (jnp.dot(a3.astype(cdt), gwi_ref[...], preferred_element_type=f32)
             + jnp.dot(h.astype(cdt), gwh_ref[...], preferred_element_type=f32)
             + gb_ref[...])                                         # (TB, GF)

    r = jax.nn.sigmoid(gates[:, 0:ais])
    z = jax.nn.sigmoid(gates[:, ais:2 * ais])
    n = jnp.tanh(gates[:, 2 * ais:3 * ais] + r * gates[:, 3 * ais:4 * ais])

    out_ref[...] = ((1.0 - z) * n + z * h).astype(out_ref.dtype)


# ---------------------------------------------------------------------------
# Wrapper
# ---------------------------------------------------------------------------
def ais_generate2(x, h, packed, *, block_batch=None):
    """Fused AISGenerate_2 forward: x:[B, in_dim], h:[B, ais] -> [B, ais]."""
    mlp_w, mlp_b, gru_wi, gru_wh, gru_b = packed
    B, in_dim = x.shape
    ais = h.shape[1]

    if block_batch is None:
        block_batch = min(256, _round_up(max(B, 1), 8))
    tb = block_batch
    padded_b = _round_up(B, tb)
    if padded_b != B:
        x = jnp.pad(x, ((0, padded_b - B), (0, 0)))
        h = jnp.pad(h, ((0, padded_b - B), (0, 0)))

    kernel = functools.partial(_ais_kernel, in_dim=in_dim, ais=ais)
    out = pl.pallas_call(
        kernel,
        out_shape=jax.ShapeDtypeStruct((padded_b, ais), jnp.float32),
        grid_spec=pltpu.PrefetchScalarGridSpec(
            num_scalar_prefetch=0,
            grid=(padded_b // tb,),
            in_specs=[
                pl.BlockSpec((tb, in_dim), lambda i: (i, 0)),     # x tile
                pl.BlockSpec((tb, ais), lambda i: (i, 0)),        # h tile
                pl.BlockSpec(mlp_w.shape, lambda i: (0, 0, 0)),   # resident
                pl.BlockSpec(mlp_b.shape, lambda i: (0, 0)),      # resident
                pl.BlockSpec(gru_wi.shape, lambda i: (0, 0)),     # resident
                pl.BlockSpec(gru_wh.shape, lambda i: (0, 0)),     # resident
                pl.BlockSpec(gru_b.shape, lambda i: (0, 0)),      # resident
            ],
            out_specs=pl.BlockSpec((tb, ais), lambda i: (i, 0)),
        ),
        compiler_params=pltpu.CompilerParams(
            dimension_semantics=("parallel",)),
    )(x, h, mlp_w, mlp_b, gru_wi, gru_wh, gru_b)

    return out[:B] if padded_b != B else out


# ---------------------------------------------------------------------------
# Parameter init (PyTorch-style) and packing into lane-dense blobs
# ---------------------------------------------------------------------------
def init_params(key, in_dim, ais_size):
    dims = dict(h1=64, h2=128, h3=64)

    def uniform(k, shape, bound):
        return jax.random.uniform(k, shape, jnp.float32, -bound, bound)

    keys = jax.random.split(key, 20)
    p = {}
    b1 = 1.0 / jnp.sqrt(in_dim)
    p["w1"] = uniform(keys[0], (in_dim, dims["h1"]), b1)
    p["b1"] = uniform(keys[1], (1, dims["h1"]), b1)
    b2 = 1.0 / jnp.sqrt(dims["h1"])
    p["w2"] = uniform(keys[2], (dims["h1"], dims["h2"]), b2)
    p["b2"] = uniform(keys[3], (1, dims["h2"]), b2)
    b3 = 1.0 / jnp.sqrt(dims["h2"])
    p["w3"] = uniform(keys[4], (dims["h2"], dims["h3"]), b3)
    p["b3"] = uniform(keys[5], (1, dims["h3"]), b3)
    bg = 1.0 / jnp.sqrt(ais_size)
    p["wir"] = uniform(keys[6], (dims["h3"], ais_size), bg)
    p["wiz"] = uniform(keys[7], (dims["h3"], ais_size), bg)
    p["win"] = uniform(keys[8], (dims["h3"], ais_size), bg)
    p["whr"] = uniform(keys[9], (ais_size, ais_size), bg)
    p["whz"] = uniform(keys[10], (ais_size, ais_size), bg)
    p["whn"] = uniform(keys[11], (ais_size, ais_size), bg)
    p["bir"] = uniform(keys[12], (1, ais_size), bg)
    p["biz"] = uniform(keys[13], (1, ais_size), bg)
    p["bin"] = uniform(keys[14], (1, ais_size), bg)
    p["bhr"] = uniform(keys[15], (1, ais_size), bg)
    p["bhz"] = uniform(keys[16], (1, ais_size), bg)
    p["bhn"] = uniform(keys[17], (1, ais_size), bg)
    return p


def pack_params(p, in_dim, ais_size, compute_dtype=jnp.float32):
    """Packs the 20 raw params into 5 zero-padded lane-dense blobs."""
    H1, H2, H3, F = 64, 128, 64, 128
    assert in_dim <= F, "in_dim must be <= 128 for this packing"
    A = ais_size
    GF = _round_up(4 * A, 128)          # packed gate width (>= 4*ais, lane-dense)

    mlp_w = jnp.zeros((3, F, F), jnp.float32)
    mlp_w = mlp_w.at[0, :in_dim, :H1].set(p["w1"])
    mlp_w = mlp_w.at[1, :H1, :H2].set(p["w2"])
    mlp_w = mlp_w.at[2, :H2, :H3].set(p["w3"])

    mlp_b = jnp.zeros((3, F), jnp.float32)
    mlp_b = mlp_b.at[0, :H1].set(p["b1"][0])
    mlp_b = mlp_b.at[1, :H2].set(p["b2"][0])
    mlp_b = mlp_b.at[2, :H3].set(p["b3"][0])

    # Input-side gate weights: rows 0:H3 real (a3 pad rows are zero), columns
    # [Wir | Wiz | Win | 0].
    gru_wi = jnp.zeros((F, GF), jnp.float32)
    gru_wi = gru_wi.at[:H3, 0:A].set(p["wir"])
    gru_wi = gru_wi.at[:H3, A:2 * A].set(p["wiz"])
    gru_wi = gru_wi.at[:H3, 2 * A:3 * A].set(p["win"])

    # Hidden-side gate weights: columns [Whr | Whz | 0 | Whn].
    gru_wh = jnp.zeros((A, GF), jnp.float32)
    gru_wh = gru_wh.at[:, 0:A].set(p["whr"])
    gru_wh = gru_wh.at[:, A:2 * A].set(p["whz"])
    gru_wh = gru_wh.at[:, 3 * A:4 * A].set(p["whn"])

    # Packed gate bias: r/z biases folded (exact in f32); bin / bhn kept apart.
    gru_b = jnp.zeros((1, GF), jnp.float32)
    gru_b = gru_b.at[0, 0:A].set(p["bir"][0] + p["bhr"][0])
    gru_b = gru_b.at[0, A:2 * A].set(p["biz"][0] + p["bhz"][0])
    gru_b = gru_b.at[0, 2 * A:3 * A].set(p["bin"][0])
    gru_b = gru_b.at[0, 3 * A:4 * A].set(p["bhn"][0])

    return (mlp_w.astype(compute_dtype), mlp_b,
            gru_wi.astype(compute_dtype), gru_wh.astype(compute_dtype), gru_b)


def reference_forward(x, h, p):
    """Pure-JAX reference matching torch GRUCell semantics exactly."""
    a = jnp.maximum(x @ p["w1"] + p["b1"], 0.0)
    a = jnp.maximum(a @ p["w2"] + p["b2"], 0.0)
    a = jnp.maximum(a @ p["w3"] + p["b3"], 0.0)
    r = jax.nn.sigmoid(a @ p["wir"] + p["bir"] + h @ p["whr"] + p["bhr"])
    z = jax.nn.sigmoid(a @ p["wiz"] + p["biz"] + h @ p["whz"] + p["bhz"])
    n = jnp.tanh(a @ p["win"] + p["bin"] + r * (h @ p["whn"] + p["bhn"]))
    return (1.0 - z) * n + z * h


if __name__ == "__main__":
    # Small shapes consistent with the module: obs_dim=12, num_actions=4, ais_size=32
    obs_dim, num_actions, ais_size = 12, 4, 32
    in_dim = obs_dim + num_actions
    batch = 8

    key = jax.random.PRNGKey(0)
    k_x, k_h, k_p, k_x2, k_h2 = jax.random.split(key, 5)
    x = jax.random.normal(k_x, (batch, in_dim), jnp.float32)
    h = jax.random.normal(k_h, (batch, ais_size), jnp.float32)
    params = init_params(k_p, in_dim, ais_size)
    packed = pack_params(params, in_dim, ais_size, compute_dtype=jnp.float32)

    out = jax.block_until_ready(ais_generate2(x, h, packed))
    ref = jax.block_until_ready(reference_forward(x, h, params))
    assert out.shape == (batch, ais_size)
    assert jnp.allclose(out, ref, atol=1e-4, rtol=1e-4), "mismatch vs reference"

    # Exercise the padded-batch path (batch not a multiple of the tile).
    x2 = jax.random.normal(k_x2, (13, in_dim), jnp.float32)
    h2 = jax.random.normal(k_h2, (13, ais_size), jnp.float32)
    out2 = jax.block_until_ready(ais_generate2(x2, h2, packed))
    ref2 = reference_forward(x2, h2, params)
    assert out2.shape == (13, ais_size)
    assert jnp.allclose(out2, ref2, atol=1e-4, rtol=1e-4), "mismatch (padded batch)"

    print("KERNEL_OK")
</pallas_src>

<mosaic_0001>
module attributes {stable_mosaic.version = 11 : i64} {
  func.func @_ais_kernel(%arg0: i32, %arg1: memref<8x16xf32, #tpu.memory_space<vmem>>, %arg2: memref<8x32xf32, #tpu.memory_space<vmem>>, %arg3: memref<3x128x128xf32, #tpu.memory_space<vmem>>, %arg4: memref<3x128xf32, #tpu.memory_space<vmem>>, %arg5: memref<128x128xf32, #tpu.memory_space<vmem>>, %arg6: memref<32x128xf32, #tpu.memory_space<vmem>>, %arg7: memref<1x128xf32, #tpu.memory_space<vmem>>, %arg8: memref<8x32xf32, #tpu.memory_space<vmem>>) attributes {dimension_semantics = [#tpu.dimension_semantics<parallel>], iteration_bounds = array<i64: 1>, scalar_prefetch = 0 : i64, scratch_operands = 0 : i64, tpu.core_type = #tpu.core_type<tc>, window_params = [{transform_indices = @transform_0, window_bounds = array<i64: 8, 16>}, {transform_indices = @transform_1, window_bounds = array<i64: 8, 32>}, {pipeline_mode = #tpu.pipeline_mode<synchronous>, transform_indices = @transform_2, window_bounds = array<i64: 3, 128, 128>}, {pipeline_mode = #tpu.pipeline_mode<synchronous>, transform_indices = @transform_3, window_bounds = array<i64: 3, 128>}, {pipeline_mode = #tpu.pipeline_mode<synchronous>, transform_indices = @transform_4, window_bounds = array<i64: 128, 128>}, {pipeline_mode = #tpu.pipeline_mode<synchronous>, transform_indices = @transform_5, window_bounds = array<i64: 32, 128>}, {pipeline_mode = #tpu.pipeline_mode<synchronous>, transform_indices = @transform_6, window_bounds = array<i64: 1, 128>}, {transform_indices = @transform_7, window_bounds = array<i64: 8, 32>}]} {
    %c0 = arith.constant 0 : index
    %c0_0 = arith.constant 0 : index
    %0 = vector.load %arg1[%c0, %c0_0] : memref<8x16xf32, #tpu.memory_space<vmem>>, vector<8x16xf32>
    %c0_1 = arith.constant 0 : index
    %c0_2 = arith.constant 0 : index
    %1 = vector.load %arg2[%c0_1, %c0_2] : memref<8x32xf32, #tpu.memory_space<vmem>>, vector<8x32xf32>
    %c0_3 = arith.constant 0 : index
    %c0_4 = arith.constant 0 : index
    %c0_5 = arith.constant 0 : index
    %2 = vector.load %arg3[%c0_3, %c0_4, %c0_5] : memref<3x128x128xf32, #tpu.memory_space<vmem>>, vector<1x128x128xf32>
    %3 = vector.shape_cast %2 : vector<1x128x128xf32> to vector<128x128xf32>
    %4 = vector.extract_strided_slice %3 {offsets = [0, 0], sizes = [16, 128], strides = [1, 1]} : vector<128x128xf32> to vector<16x128xf32>
    %cst = arith.constant dense<0.000000e+00> : vector<8x128xf32>
    %5 = tpu.matmul %0, %4, %cst {dimension_numbers = #tpu.dot_dimension_numbers<[1], [0], [0], [1], [0, 0, 1, 1], [], []>} : vector<8x16xf32>, vector<16x128xf32>, vector<8x128xf32> -> vector<8x128xf32>
    %c0_6 = arith.constant 0 : index
    %c0_7 = arith.constant 0 : index
    %6 = vector.load %arg4[%c0_6, %c0_7] : memref<3x128xf32, #tpu.memory_space<vmem>>, vector<1x128xf32>
    %7 = vector.broadcast %6 : vector<1x128xf32> to vector<8x128xf32>
    %8 = arith.addf %5, %7 : vector<8x128xf32>
    %cst_8 = arith.constant 0.000000e+00 : f32
    %9 = vector.broadcast %cst_8 : f32 to vector<8x128xf32>
    %10 = arith.maximumf %8, %9 : vector<8x128xf32>
    %c1 = arith.constant 1 : index
    %c0_9 = arith.constant 0 : index
    %c0_10 = arith.constant 0 : index
    %11 = vector.load %arg3[%c1, %c0_9, %c0_10] : memref<3x128x128xf32, #tpu.memory_space<vmem>>, vector<1x128x128xf32>
    %12 = vector.shape_cast %11 : vector<1x128x128xf32> to vector<128x128xf32>
    %cst_11 = arith.constant dense<0.000000e+00> : vector<8x128xf32>
    %13 = tpu.matmul %10, %12, %cst_11 {dimension_numbers = #tpu.dot_dimension_numbers<[1], [0], [0], [1], [0, 0, 1, 1], [], []>} : vector<8x128xf32>, vector<128x128xf32>, vector<8x128xf32> -> vector<8x128xf32>
    %c1_12 = arith.constant 1 : index
    %c0_13 = arith.constant 0 : index
    %14 = vector.load %arg4[%c1_12, %c0_13] : memref<3x128xf32, #tpu.memory_space<vmem>>, vector<1x128xf32>
    %15 = vector.broadcast %14 : vector<1x128xf32> to vector<8x128xf32>
    %16 = arith.addf %13, %15 : vector<8x128xf32>
    %cst_14 = arith.constant 0.000000e+00 : f32
    %17 = vector.broadcast %cst_14 : f32 to vector<8x128xf32>
    %18 = arith.maximumf %16, %17 : vector<8x128xf32>
    %c2 = arith.constant 2 : index
    %c0_15 = arith.constant 0 : index
    %c0_16 = arith.constant 0 : index
    %19 = vector.load %arg3[%c2, %c0_15, %c0_16] : memref<3x128x128xf32, #tpu.memory_space<vmem>>, vector<1x128x128xf32>
    %20 = vector.shape_cast %19 : vector<1x128x128xf32> to vector<128x128xf32>
    %cst_17 = arith.constant dense<0.000000e+00> : vector<8x128xf32>
    %21 = tpu.matmul %18, %20, %cst_17 {dimension_numbers = #tpu.dot_dimension_numbers<[1], [0], [0], [1], [0, 0, 1, 1], [], []>} : vector<8x128xf32>, vector<128x128xf32>, vector<8x128xf32> -> vector<8x128xf32>
    %c2_18 = arith.constant 2 : index
    %c0_19 = arith.constant 0 : index
    %22 = vector.load %arg4[%c2_18, %c0_19] : memref<3x128xf32, #tpu.memory_space<vmem>>, vector<1x128xf32>
    %23 = vector.broadcast %22 : vector<1x128xf32> to vector<8x128xf32>
    %24 = arith.addf %21, %23 : vector<8x128xf32>
    %cst_20 = arith.constant 0.000000e+00 : f32
    %25 = vector.broadcast %cst_20 : f32 to vector<8x128xf32>
    %26 = arith.maximumf %24, %25 : vector<8x128xf32>
    %c0_21 = arith.constant 0 : index
    %c0_22 = arith.constant 0 : index
    %27 = vector.load %arg5[%c0_21, %c0_22] : memref<128x128xf32, #tpu.memory_space<vmem>>, vector<128x128xf32>
    %cst_23 = arith.constant dense<0.000000e+00> : vector<8x128xf32>
    %28 = tpu.matmul %26, %27, %cst_23 {dimension_numbers = #tpu.dot_dimension_numbers<[1], [0], [0], [1], [0, 0, 1, 1], [], []>} : vector<8x128xf32>, vector<128x128xf32>, vector<8x128xf32> -> vector<8x128xf32>
    %c0_24 = arith.constant 0 : index
    %c0_25 = arith.constant 0 : index
    %29 = vector.load %arg6[%c0_24, %c0_25] : memref<32x128xf32, #tpu.memory_space<vmem>>, vector<32x128xf32>
    %cst_26 = arith.constant dense<0.000000e+00> : vector<8x128xf32>
    %30 = tpu.matmul %1, %29, %cst_26 {dimension_numbers = #tpu.dot_dimension_numbers<[1], [0], [0], [1], [0, 0, 1, 1], [], []>} : vector<8x32xf32>, vector<32x128xf32>, vector<8x128xf32> -> vector<8x128xf32>
    %31 = arith.addf %28, %30 : vector<8x128xf32>
    %c0_27 = arith.constant 0 : index
    %c0_28 = arith.constant 0 : index
    %32 = vector.load %arg7[%c0_27, %c0_28] : memref<1x128xf32, #tpu.memory_space<vmem>>, vector<1x128xf32>
    %33 = vector.broadcast %32 : vector<1x128xf32> to vector<8x128xf32>
    %34 = arith.addf %31, %33 : vector<8x128xf32>
    %35 = vector.extract_strided_slice %34 {offsets = [0, 0], sizes = [8, 32], strides = [1, 1]} : vector<8x128xf32> to vector<8x32xf32>
    %36 = arith.negf %35 : vector<8x32xf32>
    %37 = math.exp %36 : vector<8x32xf32>
    %cst_29 = arith.constant 1.000000e+00 : f32
    %38 = vector.broadcast %cst_29 : f32 to vector<8x32xf32>
    %39 = arith.addf %38, %37 : vector<8x32xf32>
    %40 = arith.divf %38, %39 : vector<8x32xf32>
    %41 = vector.extract_strided_slice %34 {offsets = [0, 32], sizes = [8, 32], strides = [1, 1]} : vector<8x128xf32> to vector<8x32xf32>
    %42 = arith.negf %41 : vector<8x32xf32>
    %43 = math.exp %42 : vector<8x32xf32>
    %cst_30 = arith.constant 1.000000e+00 : f32
    %44 = vector.broadcast %cst_30 : f32 to vector<8x32xf32>
    %45 = arith.addf %44, %43 : vector<8x32xf32>
    %46 = arith.divf %44, %45 : vector<8x32xf32>
    %47 = vector.extract_strided_slice %34 {offsets = [0, 64], sizes = [8, 32], strides = [1, 1]} : vector<8x128xf32> to vector<8x32xf32>
    %48 = vector.extract_strided_slice %34 {offsets = [0, 96], sizes = [8, 32], strides = [1, 1]} : vector<8x128xf32> to vector<8x32xf32>
    %49 = arith.mulf %40, %48 : vector<8x32xf32>
    %50 = arith.addf %47, %49 : vector<8x32xf32>
    %51 = math.tanh %50 : vector<8x32xf32>
    %cst_31 = arith.constant 1.000000e+00 : f32
    %52 = vector.broadcast %cst_31 : f32 to vector<8x32xf32>
    %53 = arith.subf %52, %46 : vector<8x32xf32>
    %54 = arith.mulf %53, %51 : vector<8x32xf32>
    %55 = arith.mulf %46, %1 : vector<8x32xf32>
    %56 = arith.addf %54, %55 : vector<8x32xf32>
    %c0_32 = arith.constant 0 : index
    %c0_33 = arith.constant 0 : index
    %57 = vector.load %arg8[%c0_32, %c0_33] : memref<8x32xf32, #tpu.memory_space<vmem>>, vector<8x32xf32>
    tpu.vector_store %arg8[%c0_32, %c0_33], %56 {strides = array<i32>} : memref<8x32xf32, #tpu.memory_space<vmem>>, vector<8x32xf32>,
    return
  }
  func.func @transform_0(%arg0: i32) -> (i32, i32) {
    %c0_i32 = arith.constant 0 : i32
    %c0_i32_0 = arith.constant 0 : i32
    return %arg0, %c0_i32 : i32, i32
  }
  func.func @transform_1(%arg0: i32) -> (i32, i32) {
    %c0_i32 = arith.constant 0 : i32
    %c0_i32_0 = arith.constant 0 : i32
    return %arg0, %c0_i32 : i32, i32
  }
  func.func @transform_2(%arg0: i32) -> (i32, i32, i32) {
    %c0_i32 = arith.constant 0 : i32
    %c0_i32_0 = arith.constant 0 : i32
    %c0_i32_1 = arith.constant 0 : i32
    %c0_i32_2 = arith.constant 0 : i32
    return %c0_i32, %c0_i32_0, %c0_i32_1 : i32, i32, i32
  }
  func.func @transform_3(%arg0: i32) -> (i32, i32) {
    %c0_i32 = arith.constant 0 : i32
    %c0_i32_0 = arith.constant 0 : i32
    %c0_i32_1 = arith.constant 0 : i32
    return %c0_i32, %c0_i32_0 : i32, i32
  }
  func.func @transform_4(%arg0: i32) -> (i32, i32) {
    %c0_i32 = arith.constant 0 : i32
    %c0_i32_0 = arith.constant 0 : i32
    %c0_i32_1 = arith.constant 0 : i32
    return %c0_i32, %c0_i32_0 : i32, i32
  }
  func.func @transform_5(%arg0: i32) -> (i32, i32) {
    %c0_i32 = arith.constant 0 : i32
    %c0_i32_0 = arith.constant 0 : i32
    %c0_i32_1 = arith.constant 0 : i32
    return %c0_i32, %c0_i32_0 : i32, i32
  }
  func.func @transform_6(%arg0: i32) -> (i32, i32) {
    %c0_i32 = arith.constant 0 : i32
    %c0_i32_0 = arith.constant 0 : i32
    %c0_i32_1 = arith.constant 0 : i32
    return %c0_i32, %c0_i32_0 : i32, i32
  }
  func.func @transform_7(%arg0: i32) -> (i32, i32) {
    %c0_i32 = arith.constant 0 : i32
    %c0_i32_0 = arith.constant 0 : i32
    return %arg0, %c0_i32 : i32, i32
  }
}

</mosaic_0001>

<llo_original>
// kernel: tpu_custom_call.1
$region0: #{tpu_custom_call.1}
  #allocation0 [shape = 'u32[]', space=smem, size = 0x4, offset = 0x4, fixed_abs, tag = 'smem constant byte address 0x4 - core index']
  #allocation1 [shape = 'u32[72,128]{1,0:T(1,128)}', space=vmem, size = 0x9000, scoped, tag = 'internal scratch']
  %s0 = inlined_call_operand.hbm [shape: f32[8,16], index: 0, kind: input, shape index: {}]
  %s1 = inlined_call_operand.hbm [shape: f32[8,32], index: 1, kind: input, shape index: {}]
  %s2 = inlined_call_operand.hbm [shape: f32[3,128,128], index: 2, kind: input, shape index: {}]
  %s3 = inlined_call_operand.hbm [shape: f32[3,128], index: 3, kind: input, shape index: {}]
  %s4 = inlined_call_operand.hbm [shape: f32[128,128], index: 4, kind: input, shape index: {}]
  %s5 = inlined_call_operand.hbm [shape: f32[32,128], index: 5, kind: input, shape index: {}]
  %s6 = inlined_call_operand.vmem [shape: f32[1,128], index: 6, kind: input, shape index: {}]
  %s7 = inlined_call_operand.hbm [shape: f32[8,32], index: 7, kind: output, shape index: {}]
  %s8 = sld [smem:[#allocation0]]
  $region62: #{tpu_custom_call.1} parent=0
    _
  %s10 = ssub.s32 1, %s8
  %s11 = scalar_select 0, %s10, %s8
  $region1: #{tpu_custom_call.1} parent=0
    #allocation2 [shape = 'u8[4096]{0}', space=vmem, size = 0x1000, scoped, tag = 'input window, operand 0, single buffered']
    #allocation3 [shape = 's32[1]{0}', space=sflag, size = 0x4, scoped, tag = 'scoped memory for tpu_custom_call.1']
    #allocation4 [shape = 's32[1]{0}', space=sflag, size = 0x4, scoped, tag = 'scoped memory for tpu_custom_call.1']
    #allocation5 [shape = 'u8[4096]{0}', space=vmem, size = 0x1000, scoped, tag = 'input window, operand 1, single buffered']
    #allocation6 [shape = 's32[1]{0}', space=sflag, size = 0x4, scoped, tag = 'scoped memory for tpu_custom_call.1']
    #allocation7 [shape = 'u8[196608]{0}', space=vmem, size = 0x30000, scoped, tag = 'input window, operand 2, single buffered']
    #allocation8 [shape = 'u8[2048]{0}', space=vmem, size = 0x800, scoped, tag = 'input window, operand 3, single buffered']
    #allocation9 [shape = 's32[1]{0}', space=sflag, size = 0x4, scoped, tag = 'scoped memory for tpu_custom_call.1']
    #allocation10 [shape = 'u8[65536]{0}', space=vmem, size = 0x10000, scoped, tag = 'input window, operand 4, single buffered']
    #allocation11 [shape = 'u8[16384]{0}', space=vmem, size = 0x4000, scoped, tag = 'input window, operand 5, single buffered']
    #allocation12 [shape = 's32[1]{0}', space=sflag, size = 0x4, scoped, tag = 'scoped memory for tpu_custom_call.1']
    #allocation13 [shape = 'u8[4096]{0}', space=vmem, size = 0x1000, scoped, tag = 'output window, operand 0, single buffered']
    %12 = vsyncpa [#allocation3], 0
    %13 = vsyncpa [#allocation6], 0
    %14 = vsyncpa [#allocation9], 0
    %15 = vsyncpa [#allocation12], 0
    %16 = vsyncpa [#allocation4], 0
    // Predicated region
    $region2: #{tpu_custom_call.1} parent=1 // pred_check
      _
    $region3: #{tpu_custom_call.1} parent=1 // pred_check_branch
      %18 = sbr.rel (0) target = $region5
    $region4: #{tpu_custom_call.1} parent=1 // pred_region
      %20 = vsyncadd [#allocation3], 0
      %s22 = sshll.u32 %s0, 4
      %s23 = int_to_ptr.hbm [resolvable:$true] %s22
      %s24 = sshll.u32 [#allocation2], 4
      %s25 = int_to_ptr.vmem [resolvable:$true] %s24
      %27 = dma.hbm_to_vmem [thread:$0]  %s23, 128, %s25, [#allocation3]
    $region5: #{tpu_custom_call.1} parent=1 // pred_fallthru
      _
    // Predicated region
    $region6: #{tpu_custom_call.1} parent=1 // pred_check
      _
    $region7: #{tpu_custom_call.1} parent=1 // pred_check_branch
      %29 = sbr.rel (0) target = $region9
    $region8: #{tpu_custom_call.1} parent=1 // pred_region
      %31 = vsyncadd [#allocation6], 0
      %s33 = sshll.u32 %s1, 4
      %s34 = int_to_ptr.hbm [resolvable:$true] %s33
      %s35 = sshll.u32 [#allocation5], 4
      %s36 = int_to_ptr.vmem [resolvable:$true] %s35
      %38 = dma.hbm_to_vmem [thread:$0]  %s34, 128, %s36, [#allocation6]
    $region9: #{tpu_custom_call.1} parent=1 // pred_fallthru
      _
    // Predicated region
    $region10: #{tpu_custom_call.1} parent=1 // pred_check
      _
    $region11: #{tpu_custom_call.1} parent=1 // pred_check_branch
      %40 = sbr.rel (0) target = $region13
    $region12: #{tpu_custom_call.1} parent=1 // pred_region
      %42 = vsyncadd [#allocation6], 0
      %s43 = sshll.u32 %s2, 4
      %s44 = int_to_ptr.hbm [resolvable:$true] %s43
      %s45 = sshll.u32 [#allocation7], 4
      %s46 = int_to_ptr.vmem [resolvable:$true] %s45
      %51 = dma.hbm_to_vmem [thread:$0]  %s44, 6144, %s46, [#allocation6], 128, 128, 8
    $region13: #{tpu_custom_call.1} parent=1 // pred_fallthru
      _
    // Predicated region
    $region14: #{tpu_custom_call.1} parent=1 // pred_check
      _
    $region15: #{tpu_custom_call.1} parent=1 // pred_check_branch
      %53 = sbr.rel (0) target = $region17
    $region16: #{tpu_custom_call.1} parent=1 // pred_region
      %55 = vsyncadd [#allocation9], 0
      %s57 = sshll.u32 %s3, 4
      %s58 = int_to_ptr.hbm [resolvable:$true] %s57
      %s59 = sshll.u32 [#allocation8], 4
      %s60 = int_to_ptr.vmem [resolvable:$true] %s59
      %62 = dma.hbm_to_vmem [thread:$0]  %s58, 64, %s60, [#allocation9]
    $region17: #{tpu_custom_call.1} parent=1 // pred_fallthru
      _
    // Predicated region
    $region18: #{tpu_custom_call.1} parent=1 // pred_check
      _
    $region19: #{tpu_custom_call.1} parent=1 // pred_check_branch
      %64 = sbr.rel (0) target = $region21
    $region20: #{tpu_custom_call.1} parent=1 // pred_region
      %66 = vsyncadd [#allocation9], 0
      %s67 = sshll.u32 %s4, 4
      %s68 = int_to_ptr.hbm [resolvable:$true] %s67
      %s69 = sshll.u32 [#allocation10], 4
      %s70 = int_to_ptr.vmem [resolvable:$true] %s69
      %75 = dma.hbm_to_vmem [thread:$0]  %s68, 2048, %s70, [#allocation9], 128, 128, 8
    $region21: #{tpu_custom_call.1} parent=1 // pred_fallthru
      _
    // Predicated region
    $region22: #{tpu_custom_call.1} parent=1 // pred_check
      _
    $region23: #{tpu_custom_call.1} parent=1 // pred_check_branch
      %77 = sbr.rel (0) target = $region25
    $region24: #{tpu_custom_call.1} parent=1 // pred_region
      %79 = vsyncadd [#allocation12], 0
      %s80 = sshll.u32 %s5, 4
      %s81 = int_to_ptr.hbm [resolvable:$true] %s80
      %s82 = sshll.u32 [#allocation11], 4
      %s83 = int_to_ptr.vmem [resolvable:$true] %s82
      %88 = dma.hbm_to_vmem [thread:$0]  %s81, 512, %s83, [#allocation12], 128, 128, 8
    $region25: #{tpu_custom_call.1} parent=1 // pred_fallthru
      _
    // Predicated region
    $region26: #{tpu_custom_call.1} parent=1 // pred_check
      _
    $region27: #{tpu_custom_call.1} parent=1 // pred_check_branch
      %90 = sbr.rel (0) target = $region29
    $region28: #{tpu_custom_call.1} parent=1 // pred_region
      _
    $region29: #{tpu_custom_call.1} parent=1 // pred_fallthru
      _
    // Predicated region
    $region30: #{tpu_custom_call.1} parent=1 // pred_check
      _
    $region31: #{tpu_custom_call.1} parent=1 // pred_check_branch
      %92 = sbr.rel (0) target = $region33
    $region32: #{tpu_custom_call.1} parent=1 // pred_region
      %94 = dma.done [#allocation3], 128
    $region33: #{tpu_custom_call.1} parent=1 // pred_fallthru
      _
    // Predicated region
    $region34: #{tpu_custom_call.1} parent=1 // pred_check
      _
    $region35: #{tpu_custom_call.1} parent=1 // pred_check_branch
      %96 = sbr.rel (0) target = $region37
    $region36: #{tpu_custom_call.1} parent=1 // pred_region
      %98 = dma.done [#allocation6], 128
    $region37: #{tpu_custom_call.1} parent=1 // pred_fallthru
      _
    // Predicated region
    $region38: #{tpu_custom_call.1} parent=1 // pred_check
      _
    $region39: #{tpu_custom_call.1} parent=1 // pred_check_branch
      %100 = sbr.rel (0) target = $region41
    $region40: #{tpu_custom_call.1} parent=1 // pred_region
      %102 = dma.done [#allocation6], 6144
    $region41: #{tpu_custom_call.1} parent=1 // pred_fallthru
      _
    // Predicated region
    $region42: #{tpu_custom_call.1} parent=1 // pred_check
      _
    $region43: #{tpu_custom_call.1} parent=1 // pred_check_branch
      %104 = sbr.rel (0) target = $region45
    $region44: #{tpu_custom_call.1} parent=1 // pred_region
      %106 = dma.done [#allocation9], 64
    $region45: #{tpu_custom_call.1} parent=1 // pred_fallthru
      _
    // Predicated region
    $region46: #{tpu_custom_call.1} parent=1 // pred_check
      _
    $region47: #{tpu_custom_call.1} parent=1 // pred_check_branch
      %108 = sbr.rel (0) target = $region49
    $region48: #{tpu_custom_call.1} parent=1 // pred_region
      %110 = dma.done [#allocation9], 2048
    $region49: #{tpu_custom_call.1} parent=1 // pred_fallthru
      _
    // Predicated region
    $region50: #{tpu_custom_call.1} parent=1 // pred_check
      _
    $region51: #{tpu_custom_call.1} parent=1 // pred_check_branch
      %112 = sbr.rel (0) target = $region53
    $region52: #{tpu_custom_call.1} parent=1 // pred_region
      %114 = dma.done [#allocation12], 512
    $region53: #{tpu_custom_call.1} parent=1 // pred_fallthru
      _
    %v115 = vld [vmem:[#allocation2] sm:$0xff]
    %v116 = vld [vmem:[#allocation5] sm:$0xff]
    %v117 = vld [vmem:[#allocation7] sm:$0xff]
    %v118 = vld [vmem:[#allocation7 + $0x8] sm:$0xff]
    %v119 = vld [vmem:[#allocation8] sm:$0x1]
    %v120 = vperm.slane %v119, 0
    %vm121 = vcmask 130048
    %v123 = vsel %vm121, %v115, 0
    %125 = vmatpush.msra.mxu0 0.0
    %126 = vmatpush.msra.mxu0 0.0
    %127 = vmatpush.msra.mxu0 0.0
    %128 = vmatpush.msra.mxu0 0.0
    %129 = vmatpush.msra.mxu0 0.0
    %130 = vmatpush.msra.mxu0 0.0
    %131 = vmatpush.msra.mxu0 0.0
    %132 = vmatpush.msra.mxu0 0.0
    %133 = vmatpush.msra.mxu0 0.0
    %134 = vmatpush.msra.mxu0 0.0
    %135 = vmatpush.msra.mxu0 0.0
    %136 = vmatpush.msra.mxu0 0.0
    %137 = vmatpush.msra.mxu0 0.0
    %138 = vmatpush.msra.mxu0 0.0
    %139 = vmatpush.msra.mxu0 %v118
    %140 = vmatpush.msra.mxu0 %v117
    %141 = vmatmul.f32.gmra.mxu0 %v123
    %v142 = vpop.f32.mrf.mxu0
    %v143 = vadd.f32 %v120, %v142
    %144 = vdwg.mxu0
    %v145 = vmax.f32 %v143, 0.0
    %s146 = scalar_lea.vmem [#allocation7], 128
    %v147 = vld [vmem:[%s146] sm:$0xff]
    %v148 = vld [vmem:[%s146 + $0x8] sm:$0xff]
    %v149 = vld [vmem:[%s146 + $0x10] sm:$0xff]
    %v150 = vld [vmem:[%s146 + $0x18] sm:$0xff]
    %v151 = vld [vmem:[%s146 + $0x20] sm:$0xff]
    %v152 = vld [vmem:[%s146 + $0x28] sm:$0xff]
    %v153 = vld [vmem:[%s146 + $0x30] sm:$0xff]
    %v154 = vld [vmem:[%s146 + $0x38] sm:$0xff]
    %v155 = vld [vmem:[%s146 + $0x40] sm:$0xff]
    %v156 = vld [vmem:[%s146 + $0x48] sm:$0xff]
    %v157 = vld [vmem:[%s146 + $0x50] sm:$0xff]
    %v158 = vld [vmem:[%s146 + $0x58] sm:$0xff]
    %v159 = vld [vmem:[%s146 + $0x60] sm:$0xff]
    %v160 = vld [vmem:[%s146 + $0x68] sm:$0xff]
    %v161 = vld [vmem:[%s146 + $0x70] sm:$0xff]
    %v162 = vld [vmem:[%s146 + $0x78] sm:$0xff]
    %v163 = vld [vmem:[#allocation8 + $0x1] sm:$0x1]
    %v164 = vperm.slane %v163, 0
    %165 = vmatpush.msra.mxu0 %v162
    %166 = vmatpush.msra.mxu0 %v161
    %167 = vmatpush.msra.mxu0 %v160
    %168 = vmatpush.msra.mxu0 %v159
    %169 = vmatpush.msra.mxu0 %v158
    %170 = vmatpush.msra.mxu0 %v157
    %171 = vmatpush.msra.mxu0 %v156
    %172 = vmatpush.msra.mxu0 %v155
    %173 = vmatpush.msra.mxu0 %v154
    %174 = vmatpush.msra.mxu0 %v153
    %175 = vmatpush.msra.mxu0 %v152
    %176 = vmatpush.msra.mxu0 %v151
    %177 = vmatpush.msra.mxu0 %v150
    %178 = vmatpush.msra.mxu0 %v149
    %179 = vmatpush.msra.mxu0 %v148
    %180 = vmatpush.msra.mxu0 %v147
    %181 = vmatmul.f32.gmra.mxu0 %v145
    %v182 = vpop.f32.mrf.mxu0
    %v183 = vadd.f32 %v164, %v182
    %184 = vdwg.mxu0
    %v185 = vmax.f32 %v183, 0.0
    %s186 = scalar_lea.vmem [#allocation7], 256
    %v187 = vld [vmem:[%s186] sm:$0xff]
    %v188 = vld [vmem:[%s186 + $0x8] sm:$0xff]
    %v189 = vld [vmem:[%s186 + $0x10] sm:$0xff]
    %v190 = vld [vmem:[%s186 + $0x18] sm:$0xff]
    %v191 = vld [vmem:[%s186 + $0x20] sm:$0xff]
    %v192 = vld [vmem:[%s186 + $0x28] sm:$0xff]
    %v193 = vld [vmem:[%s186 + $0x30] sm:$0xff]
    %v194 = vld [vmem:[%s186 + $0x38] sm:$0xff]
    %v195 = vld [vmem:[%s186 + $0x40] sm:$0xff]
    %v196 = vld [vmem:[%s186 + $0x48] sm:$0xff]
    %v197 = vld [vmem:[%s186 + $0x50] sm:$0xff]
    %v198 = vld [vmem:[%s186 + $0x58] sm:$0xff]
    %v199 = vld [vmem:[%s186 + $0x60] sm:$0xff]
    %v200 = vld [vmem:[%s186 + $0x68] sm:$0xff]
    %v201 = vld [vmem:[%s186 + $0x70] sm:$0xff]
    %v202 = vld [vmem:[%s186 + $0x78] sm:$0xff]
    %v203 = vld [vmem:[#allocation8 + $0x2] sm:$0x1]
    %v204 = vperm.slane %v203, 0
    %205 = vmatpush.msra.mxu0 %v202
    %206 = vmatpush.msra.mxu0 %v201
    %207 = vmatpush.msra.mxu0 %v200
    %208 = vmatpush.msra.mxu0 %v199
    %209 = vmatpush.msra.mxu0 %v198
    %210 = vmatpush.msra.mxu0 %v197
    %211 = vmatpush.msra.mxu0 %v196
    %212 = vmatpush.msra.mxu0 %v195
    %213 = vmatpush.msra.mxu0 %v194
    %214 = vmatpush.msra.mxu0 %v193
    %215 = vmatpush.msra.mxu0 %v192
    %216 = vmatpush.msra.mxu0 %v191
    %217 = vmatpush.msra.mxu0 %v190
    %218 = vmatpush.msra.mxu0 %v189
    %219 = vmatpush.msra.mxu0 %v188
    %220 = vmatpush.msra.mxu0 %v187
    %221 = vmatmul.f32.gmra.mxu0 %v185
    %v222 = vpop.f32.mrf.mxu0
    %v223 = vadd.f32 %v204, %v222
    %224 = vdwg.mxu0
    %v225 = vmax.f32 %v223, 0.0
    %v226 = vld [vmem:[#allocation10] sm:$0xff]
    %v227 = vld [vmem:[#allocation10 + $0x8] sm:$0xff]
    %v228 = vld [vmem:[#allocation10 + $0x10] sm:$0xff]
    %v229 = vld [vmem:[#allocation10 + $0x18] sm:$0xff]
    %v230 = vld [vmem:[#allocation10 + $0x20] sm:$0xff]
    %v231 = vld [vmem:[#allocation10 + $0x28] sm:$0xff]
    %v232 = vld [vmem:[#allocation10 + $0x30] sm:$0xff]
    %v233 = vld [vmem:[#allocation10 + $0x38] sm:$0xff]
    %v234 = vld [vmem:[#allocation10 + $0x40] sm:$0xff]
    %v235 = vld [vmem:[#allocation10 + $0x48] sm:$0xff]
    %v236 = vld [vmem:[#allocation10 + $0x50] sm:$0xff]
    %v237 = vld [vmem:[#allocation10 + $0x58] sm:$0xff]
    %v238 = vld [vmem:[#allocation10 + $0x60] sm:$0xff]
    %v239 = vld [vmem:[#allocation10 + $0x68] sm:$0xff]
    %v240 = vld [vmem:[#allocation10 + $0x70] sm:$0xff]
    %v241 = vld [vmem:[#allocation10 + $0x78] sm:$0xff]
    %v242 = vld [vmem:[#allocation11] sm:$0xff]
    %v243 = vld [vmem:[#allocation11 + $0x8] sm:$0xff]
    %v244 = vld [vmem:[#allocation11 + $0x10] sm:$0xff]
    %v245 = vld [vmem:[#allocation11 + $0x18] sm:$0xff]
    %vm246 = vcmask 261120
    %v248 = vsel %vm246, %v116, 0
    %250 = vmatpush.msra.mxu0 0.0
    %251 = vmatpush.msra.mxu0 0.0
    %252 = vmatpush.msra.mxu0 0.0
    %253 = vmatpush.msra.mxu0 0.0
    %254 = vmatpush.msra.mxu0 0.0
    %255 = vmatpush.msra.mxu0 0.0
    %256 = vmatpush.msra.mxu0 0.0
    %257 = vmatpush.msra.mxu0 0.0
    %258 = vmatpush.msra.mxu0 0.0
    %259 = vmatpush.msra.mxu0 0.0
    %260 = vmatpush.msra.mxu0 0.0
    %261 = vmatpush.msra.mxu0 0.0
    %262 = vmatpush.msra.mxu0 %v245
    %263 = vmatpush.msra.mxu0 %v244
    %264 = vmatpush.msra.mxu0 %v243
    %265 = vmatpush.msra.mxu0 %v242
    %266 = vmatmul.f32.gmra.mxu0 %v248
    %v267 = vpop.f32.mrf.mxu0
    %v268 = vadd.f32 0.0, %v267
    %269 = vdwg.mxu0
    %270 = vmatpush.msra.mxu0 %v241
    %271 = vmatpush.msra.mxu0 %v240
    %272 = vmatpush.msra.mxu0 %v239
    %273 = vmatpush.msra.mxu0 %v238
    %274 = vmatpush.msra.mxu0 %v237
    %275 = vmatpush.msra.mxu0 %v236
    %276 = vmatpush.msra.mxu0 %v235
    %277 = vmatpush.msra.mxu0 %v234
    %278 = vmatpush.msra.mxu0 %v233
    %279 = vmatpush.msra.mxu0 %v232
    %280 = vmatpush.msra.mxu0 %v231
    %281 = vmatpush.msra.mxu0 %v230
    %282 = vmatpush.msra.mxu0 %v229
    %283 = vmatpush.msra.mxu0 %v228
    %284 = vmatpush.msra.mxu0 %v227
    %285 = vmatpush.msra.mxu0 %v226
    %286 = vmatmul.f32.gmra.mxu0 %v225
    %v287 = vpop.f32.mrf.mxu0
    %v288 = vadd.f32 %v268, %v287
    %289 = vdwg.mxu0
    %v290 = vld [vmem:[%s6] sm:$0x1]
    %v292 = vperm.slane %v290, 0
    %v294 = vadd.f32 %v288, %v292
    %v295 = vxor.u32 %v294, 2147483648
    %v296 = vmul.f32 %v295, 1.442695
    %v297 = vpow.pop %v296
    %v298 = vadd.f32 %v297, 1.0
    %v299 = vrcp.pop %v298
    %v300 = vmul.f32 %v298, %v299
    %v301 = vsub.f32 1.0, %v300
    %v302 = vmul.f32 %v299, %v301
    %v303 = vadd.f32 %v299, %v302
    %vm304 = vweird.f32 %v298
    %vm305 = vweird.f32 %v299
    %vm306 = vmor %vm304, %vm305
    %v307 = vsel %vm306, %v299, %v303
    %v308 = vand.u32 2147483647, %v298
    %vm309 = vcmp.eq.f32.partialorder %v308, 8.507059e+37
    %v310 = vand.u32 %v298, 2147483648
    %v311 = vor.u32 1.1754944e-38, %v310
    %v312 = vsel %vm309, %v311, %v307
    %v313 = vmul.f32 1.0, %v312
    %315 = vrot.lane.b32.xlu0 %v294, 32
    %v316 = vpop.permute.xlu0 %315
    %v318 = vmul.f32 %v313, %v316
    %320 = vrot.lane.b32.xlu0 %v318, 64
    %v321 = vpop.permute.xlu0 %320
    %v323 = vadd.f32 %v294, %v321
    %v324 = vtanh.pop %v323
    %v325 = vsub.f32 1.0, %v313
    %327 = vrot.lane.b32.xlu0 %v324, 96
    %v328 = vpop.permute.xlu0 %327
    %v330 = vmul.f32 %v325, %v328
    %331 = vrot.lane.b32.xlu0 %v116, 32
    %v332 = vpop.permute.xlu0 %331
    %v334 = vmul.f32 %v313, %v332
    %v335 = vadd.f32 %v330, %v334
    %337 = vrot.lane.b32.xlu0 %v335, 96
    %v338 = vpop.permute.xlu0 %337
    %340 = vst.msk [vmem:[#allocation13] sm:$0xff] %vm246, %v338
    // Predicated region
    $region54: #{tpu_custom_call.1} parent=1 // pred_check
      _
    $region55: #{tpu_custom_call.1} parent=1 // pred_check_branch
      %342 = sbr.rel (0) target = $region57
    $region56: #{tpu_custom_call.1} parent=1 // pred_region
      %344 = vsyncadd [#allocation4], 0
      %s346 = sshll.u32 [#allocation13], 4
      %s347 = int_to_ptr.vmem [resolvable:$true] %s346
      %s348 = sshll.u32 %s7, 4
      %s349 = int_to_ptr.hbm [resolvable:$true] %s348
      %351 = dma.vmem_to_hbm [thread:$0]  %s347, 128, %s349, [#allocation4]
    $region57: #{tpu_custom_call.1} parent=1 // pred_fallthru
      _
    // Predicated region
    $region58: #{tpu_custom_call.1} parent=1 // pred_check
      _
    $region59: #{tpu_custom_call.1} parent=1 // pred_check_branch
      %353 = sbr.rel (0) target = $region61
    $region60: #{tpu_custom_call.1} parent=1 // pred_region
      %355 = dma.done [#allocation4], 128
    $region61: #{tpu_custom_call.1} parent=1 // pred_fallthru
      _
    %356 = vsyncpa [#allocation3], 1
    %357 = vsyncpa [#allocation6], 1
    %358 = vsyncpa [#allocation9], 1
    %359 = vsyncpa [#allocation12], 1
    %360 = vsyncpa [#allocation4], 1

</llo_original>
